<compile_context>
chip_gen: v5e
topology: v5e:2x2
jax: 0.10.0
libtpu: 0.0.40
codegen_flags: <defaults>
</compile_context>

<pallas_src>
import functools

import jax
import jax.numpy as jnp
from jax.experimental import pallas as pl
from jax.experimental.pallas import tpu as pltpu


def _operator_loss_kernel(x_ref, y_ref, o_ref, *,
                          tile_rows, total_rows, scale, needs_mask):
    """x_ref/y_ref: (tile_rows, H*W) f32 blocks; o_ref: resident (1,1) f32."""
    step = pl.program_id(0)

    @pl.when(step == 0)
    def _init():
        o_ref[...] = jnp.zeros_like(o_ref)

    d = x_ref[...].astype(jnp.float32) - y_ref[...].astype(jnp.float32)
    row_sq = jnp.sum(d * d, axis=1, keepdims=True)          # (tile_rows, 1)
    norms = jnp.sqrt(row_sq)                                 # per-(b,c) Frobenius norm

    if needs_mask:
        # Mask rows of the last tile that fall past the end of the B*C axis.
        row_ids = (jax.lax.broadcasted_iota(jnp.int32, (tile_rows, 1), 0)
                   + step * tile_rows)
        norms = jnp.where(row_ids < total_rows, norms, 0.0)

    o_ref[...] += jnp.sum(norms, axis=0, keepdims=True)      # running sum in VMEM

    @pl.when(step == pl.num_programs(0) - 1)
    def _finalize():
        o_ref[...] = o_ref[...] * scale                      # a1 / (B*C)


def operator_loss(x_predicted, y, a1, *, max_block_bytes=4 * 1024 * 1024):
    """loss = a1 * mean_b(mean_c(||x_predicted - y||_F over (H,W)))."""
    assert x_predicted.shape == y.shape and x_predicted.ndim == 4
    B, C, H, W = x_predicted.shape
    rows, hw = B * C, H * W

    # Row-major reshape is a free bitcast; gives lane-dense (rows, H*W) blocks.
    xf = x_predicted.reshape(rows, hw)
    yf = y.reshape(rows, hw)

    # Row-tile sizing: keep each (double-buffered) input block at ~max_block_bytes
    # so the kernel is VMEM-safe on v7x (64 MiB) as well as v5e/v6e.
    bytes_per_row = hw * 4
    max_rows = max(8, (max_block_bytes // bytes_per_row) // 8 * 8)
    tile_rows = rows if rows <= max_rows else max_rows       # full extent if small
    grid = (pl.cdiv(rows, tile_rows),)
    needs_mask = (rows % tile_rows) != 0

    kernel = functools.partial(
        _operator_loss_kernel,
        tile_rows=tile_rows, total_rows=rows,
        scale=float(a1) / float(rows), needs_mask=needs_mask)

    out = pl.pallas_call(
        kernel,
        out_shape=jax.ShapeDtypeStruct((1, 1), jnp.float32),
        grid=grid,
        in_specs=[pl.BlockSpec((tile_rows, hw), lambda i: (i, 0)),
                  pl.BlockSpec((tile_rows, hw), lambda i: (i, 0))],
        out_specs=pl.BlockSpec((1, 1), lambda i: (0, 0)),
        compiler_params=pltpu.CompilerParams(
            dimension_semantics=("arbitrary",)),      # reduction axis
        cost_estimate=pl.CostEstimate(
            flops=3 * rows * hw + 2 * rows,
            transcendentals=rows,                     # sqrt per (b,c)
            bytes_accessed=2 * rows * hw * 4 + 4),
    )(xf, yf)
    return out[0, 0]


def operator_loss_ref(x_predicted, y, a1):
    """Pure-JAX reference matching the PyTorch module."""
    d = x_predicted - y
    per_bc = jnp.sqrt(jnp.sum(d * d, axis=(2, 3)))           # linalg.norm(dim=(2,3))
    return a1 * jnp.mean(jnp.mean(per_bc, axis=1))


if __name__ == "__main__":
    key = jax.random.PRNGKey(0)
    kx, ky = jax.random.split(key)

    B, C, H, W = 2, 4, 16, 16
    a1 = 0.7
    x_pred = jax.random.normal(kx, (B, C, H, W), jnp.float32)
    y = jax.random.normal(ky, (B, C, H, W), jnp.float32)

    loss = jax.block_until_ready(operator_loss(x_pred, y, a1))
    ref = jax.block_until_ready(operator_loss_ref(x_pred, y, a1))

    assert loss.shape == ()
    assert bool(jnp.isfinite(loss))
    assert abs(float(loss) - float(ref)) <= 1e-4 * max(1.0, abs(float(ref)))
    print("KERNEL_OK")
</pallas_src>

<mosaic_0001>
module attributes {stable_mosaic.version = 11 : i64} {
  func.func @_operator_loss_kernel(%arg0: i32, %arg1: memref<8x256xf32, #tpu.memory_space<vmem>>, %arg2: memref<8x256xf32, #tpu.memory_space<vmem>>, %arg3: memref<1x1xf32, #tpu.memory_space<vmem>>) attributes {dimension_semantics = [#tpu.dimension_semantics<arbitrary>], iteration_bounds = array<i64: 1>, scalar_prefetch = 0 : i64, scratch_operands = 0 : i64, tpu.core_type = #tpu.core_type<tc>, window_params = [{transform_indices = @transform_0, window_bounds = array<i64: 8, 256>}, {transform_indices = @transform_1, window_bounds = array<i64: 8, 256>}, {pipeline_mode = #tpu.pipeline_mode<synchronous>, transform_indices = @transform_2, window_bounds = array<i64: 1, 1>}]} {
    %c0_i32 = arith.constant 0 : i32
    %0 = arith.cmpi eq, %arg0, %c0_i32 : i32
    %1 = arith.extui %0 : i1 to i32
    %c0_i32_0 = arith.constant 0 : i32
    %2 = arith.cmpi ne, %1, %c0_i32_0 : i32
    scf.if %2 {
      %cst_11 = arith.constant 0.000000e+00 : f32
      %18 = vector.broadcast %cst_11 : f32 to vector<1x1xf32>
      %c0_12 = arith.constant 0 : index
      %c0_13 = arith.constant 0 : index
      %19 = vector.load %arg3[%c0_12, %c0_13] : memref<1x1xf32, #tpu.memory_space<vmem>>, vector<1x1xf32>
      tpu.vector_store %arg3[%c0_12, %c0_13], %18 {strides = array<i32>} : memref<1x1xf32, #tpu.memory_space<vmem>>, vector<1x1xf32>,
    } else {
    }
    %c0 = arith.constant 0 : index
    %c0_1 = arith.constant 0 : index
    %3 = vector.load %arg1[%c0, %c0_1] : memref<8x256xf32, #tpu.memory_space<vmem>>, vector<8x256xf32>
    %c0_2 = arith.constant 0 : index
    %c0_3 = arith.constant 0 : index
    %4 = vector.load %arg2[%c0_2, %c0_3] : memref<8x256xf32, #tpu.memory_space<vmem>>, vector<8x256xf32>
    %5 = arith.subf %3, %4 : vector<8x256xf32>
    %6 = arith.mulf %5, %5 : vector<8x256xf32>
    %cst = arith.constant dense<0.000000e+00> : vector<8xf32>
    %7 = vector.multi_reduction <add>, %6, %cst [1] : vector<8x256xf32> to vector<8xf32>
    %8 = vector.shape_cast %7 : vector<8xf32> to vector<8x1xf32>
    %9 = math.sqrt %8 : vector<8x1xf32>
    %c0_4 = arith.constant 0 : index
    %c0_5 = arith.constant 0 : index
    %10 = vector.load %arg3[%c0_4, %c0_5] : memref<1x1xf32, #tpu.memory_space<vmem>>, vector<1x1xf32>
    %cst_6 = arith.constant dense<0.000000e+00> : vector<1xf32>
    %11 = vector.multi_reduction <add>, %9, %cst_6 [0] : vector<8x1xf32> to vector<1xf32>
    %12 = vector.shape_cast %11 : vector<1xf32> to vector<1x1xf32>
    %13 = arith.addf %10, %12 : vector<1x1xf32>
    %c0_7 = arith.constant 0 : index
    %c0_8 = arith.constant 0 : index
    %14 = vector.load %arg3[%c0_7, %c0_8] : memref<1x1xf32, #tpu.memory_space<vmem>>, vector<1x1xf32>
    tpu.vector_store %arg3[%c0_7, %c0_8], %13 {strides = array<i32>} : memref<1x1xf32, #tpu.memory_space<vmem>>, vector<1x1xf32>,
    %c0_i32_9 = arith.constant 0 : i32
    %15 = arith.cmpi eq, %arg0, %c0_i32_9 : i32
    %16 = arith.extui %15 : i1 to i32
    %c0_i32_10 = arith.constant 0 : i32
    %17 = arith.cmpi ne, %16, %c0_i32_10 : i32
    scf.if %17 {
      %c0_11 = arith.constant 0 : index
      %c0_12 = arith.constant 0 : index
      %18 = vector.load %arg3[%c0_11, %c0_12] : memref<1x1xf32, #tpu.memory_space<vmem>>, vector<1x1xf32>
      %cst_13 = arith.constant 0.0874999985 : f32
      %19 = vector.broadcast %cst_13 : f32 to vector<1x1xf32>
      %20 = arith.mulf %18, %19 : vector<1x1xf32>
      %c0_14 = arith.constant 0 : index
      %c0_15 = arith.constant 0 : index
      %21 = vector.load %arg3[%c0_14, %c0_15] : memref<1x1xf32, #tpu.memory_space<vmem>>, vector<1x1xf32>
      tpu.vector_store %arg3[%c0_14, %c0_15], %20 {strides = array<i32>} : memref<1x1xf32, #tpu.memory_space<vmem>>, vector<1x1xf32>,
    } else {
    }
    return
  }
  func.func @transform_0(%arg0: i32) -> (i32, i32) {
    %c0_i32 = arith.constant 0 : i32
    %c0_i32_0 = arith.constant 0 : i32
    return %arg0, %c0_i32 : i32, i32
  }
  func.func @transform_1(%arg0: i32) -> (i32, i32) {
    %c0_i32 = arith.constant 0 : i32
    %c0_i32_0 = arith.constant 0 : i32
    return %arg0, %c0_i32 : i32, i32
  }
  func.func @transform_2(%arg0: i32) -> (i32, i32) {
    %c0_i32 = arith.constant 0 : i32
    %c0_i32_0 = arith.constant 0 : i32
    %c0_i32_1 = arith.constant 0 : i32
    return %c0_i32, %c0_i32_0 : i32, i32
  }
}

</mosaic_0001>

<llo_original>
// kernel: tpu_custom_call.1
$region0: #{tpu_custom_call.1}
  #allocation0 [shape = 'u32[]', space=smem, size = 0x4, offset = 0x4, fixed_abs, tag = 'smem constant byte address 0x4 - core index']
  #allocation1 [shape = 'u32[72,128]{1,0:T(1,128)}', space=vmem, size = 0x9000, scoped, tag = 'internal scratch']
  %s0 = inlined_call_operand.hbm [shape: f32[8,256], index: 0, kind: input, shape index: {}]
  %s1 = inlined_call_operand.hbm [shape: f32[8,256], index: 1, kind: input, shape index: {}]
  %s2 = inlined_call_operand.hbm [shape: f32[1,1], index: 2, kind: output, shape index: {}]
  %s3 = sld [smem:[#allocation0]]
  $region34: #{tpu_custom_call.1} parent=0
    _
  %s5 = ssub.s32 1, %s3
  %s6 = scalar_select 0, %s5, %s3
  $region1: #{tpu_custom_call.1} parent=0
    #allocation2 [shape = 'u8[8192]{0}', space=vmem, size = 0x2000, scoped, tag = 'input window, operand 0, single buffered']
    #allocation3 [shape = 's32[1]{0}', space=sflag, size = 0x4, scoped, tag = 'scoped memory for tpu_custom_call.1']
    #allocation4 [shape = 's32[1]{0}', space=sflag, size = 0x4, scoped, tag = 'scoped memory for tpu_custom_call.1']
    #allocation5 [shape = 'u8[8192]{0}', space=vmem, size = 0x2000, scoped, tag = 'input window, operand 1, single buffered']
    #allocation6 [shape = 's32[1]{0}', space=sflag, size = 0x4, scoped, tag = 'scoped memory for tpu_custom_call.1']
    #allocation7 [shape = 'u8[512]{0}', space=vmem, size = 0x400, scoped, tag = 'output window, operand 0, single buffered']
    %7 = vsyncpa [#allocation3], 0
    %8 = vsyncpa [#allocation6], 0
    %9 = vsyncpa [#allocation4], 0
    // Predicated region
    $region2: #{tpu_custom_call.1} parent=1 // pred_check
      _
    $region3: #{tpu_custom_call.1} parent=1 // pred_check_branch
      %11 = sbr.rel (0) target = $region5
    $region4: #{tpu_custom_call.1} parent=1 // pred_region
      %13 = vsyncadd [#allocation3], 0
      %s15 = sshll.u32 %s0, 4
      %s16 = int_to_ptr.hbm [resolvable:$true] %s15
      %s17 = sshll.u32 [#allocation2], 4
      %s18 = int_to_ptr.vmem [resolvable:$true] %s17
      %20 = dma.hbm_to_vmem [thread:$0]  %s16, 256, %s18, [#allocation3]
    $region5: #{tpu_custom_call.1} parent=1 // pred_fallthru
      _
    // Predicated region
    $region6: #{tpu_custom_call.1} parent=1 // pred_check
      _
    $region7: #{tpu_custom_call.1} parent=1 // pred_check_branch
      %22 = sbr.rel (0) target = $region9
    $region8: #{tpu_custom_call.1} parent=1 // pred_region
      %24 = vsyncadd [#allocation6], 0
      %s26 = sshll.u32 %s1, 4
      %s27 = int_to_ptr.hbm [resolvable:$true] %s26
      %s28 = sshll.u32 [#allocation5], 4
      %s29 = int_to_ptr.vmem [resolvable:$true] %s28
      %31 = dma.hbm_to_vmem [thread:$0]  %s27, 256, %s29, [#allocation6]
    $region9: #{tpu_custom_call.1} parent=1 // pred_fallthru
      _
    // Predicated region
    $region10: #{tpu_custom_call.1} parent=1 // pred_check
      _
    $region11: #{tpu_custom_call.1} parent=1 // pred_check_branch
      %33 = sbr.rel (0) target = $region13
    $region12: #{tpu_custom_call.1} parent=1 // pred_region
      %35 = dma.done [#allocation3], 256
    $region13: #{tpu_custom_call.1} parent=1 // pred_fallthru
      _
    // Predicated region
    $region14: #{tpu_custom_call.1} parent=1 // pred_check
      _
    $region15: #{tpu_custom_call.1} parent=1 // pred_check_branch
      %37 = sbr.rel (0) target = $region17
    $region16: #{tpu_custom_call.1} parent=1 // pred_region
      %39 = dma.done [#allocation6], 256
    $region17: #{tpu_custom_call.1} parent=1 // pred_fallthru
      _
    %p40 = scmp.eq.s32.totalorder 0, 0
    // Predicated region
    $region18: #{tpu_custom_call.1} parent=1 // pred_check
      %p41 = pneg %p40
    $region19: #{tpu_custom_call.1} parent=1 // pred_check_branch
      %43 = sbr.rel (%p41) target = $region21
    $region20: #{tpu_custom_call.1} parent=1 // pred_region
      %vm44 = vcmask 0
      %45 = vst.msk [vmem:[#allocation7] sm:$0x1] %vm44, 0.0
    $region21: #{tpu_custom_call.1} parent=1 // pred_fallthru
      _
    %v46 = vld [vmem:[#allocation2] sm:$0xff]
    %v47 = vld [vmem:[#allocation2 + $0x8] sm:$0xff]
    %v48 = vld [vmem:[#allocation5] sm:$0xff]
    %v49 = vld [vmem:[#allocation5 + $0x8] sm:$0xff]
    %v50 = vsub.f32 %v46, %v48
    %v51 = vsub.f32 %v47, %v49
    %v52 = vmul.f32 %v50, %v50
    %v53 = vmul.f32 %v51, %v51
    %v54 = vadd.f32 %v52, %v53
    %55 = vadd.xlane.f32.xlu0 %v54
    %v56 = vpop.xlane.xlu0 %55
    %v57 = vrsqrt.pop %v56
    %v58 = vmul.f32 %v57, %v56
    %v59 = vmul.f32 %v58, %v57
    %v60 = vmul.f32 0.5, %v59
    %v61 = vsub.f32 1.5, %v60
    %v62 = vmul.f32 %v57, %v61
    %v63 = vmul.f32 %v56, %v62
    %vm64 = vcmp.eq.f32.partialorder %v56, inf
    %v65 = vsel %vm64, %v56, %v63
    %vm66 = vcmp.eq.f32.partialorder %v56, 0.0
    %v67 = vand.u32 %v56, 2147483648
    %v68 = vsel %vm66, %v67, %v65
    %v69 = vld [vmem:[#allocation7] sm:$0x1]
    %v70 = vrot.slane %v68, 4
    %v71 = vadd.f32 %v68, %v70
    %v72 = vrot.slane %v71, 2
    %v73 = vadd.f32 %v71, %v72
    %v74 = vrot.slane %v73, 1
    %v75 = vadd.f32 %v73, %v74
    %v76 = vadd.f32 %v69, %v75
    %vm77 = vcmask 0
    %78 = vst.msk [vmem:[#allocation7] sm:$0x1] %vm77, %v76
    // Predicated region
    $region22: #{tpu_custom_call.1} parent=1 // pred_check
      %p79 = pneg %p40
    $region23: #{tpu_custom_call.1} parent=1 // pred_check_branch
      %81 = sbr.rel (%p79) target = $region25
    $region24: #{tpu_custom_call.1} parent=1 // pred_region
      %v82 = vld [vmem:[#allocation7] sm:$0x1]
      %v83 = vmul.f32 %v82, 0.0875
      %84 = vst.msk [vmem:[#allocation7] sm:$0x1] %vm77, %v83
    $region25: #{tpu_custom_call.1} parent=1 // pred_fallthru
      _
    // Predicated region
    $region26: #{tpu_custom_call.1} parent=1 // pred_check
      _
    $region27: #{tpu_custom_call.1} parent=1 // pred_check_branch
      %86 = sbr.rel (0) target = $region29
    $region28: #{tpu_custom_call.1} parent=1 // pred_region
      %88 = vsyncadd [#allocation4], 0
      %s90 = sshll.u32 [#allocation7], 4
      %s91 = int_to_ptr.vmem [resolvable:$true] %s90
      %s92 = sshll.u32 %s2, 4
      %s93 = int_to_ptr.hbm [resolvable:$true] %s92
      %95 = dma.vmem_to_hbm [thread:$0]  %s91, 16, %s93, [#allocation4]
    $region29: #{tpu_custom_call.1} parent=1 // pred_fallthru
      _
    // Predicated region
    $region30: #{tpu_custom_call.1} parent=1 // pred_check
      _
    $region31: #{tpu_custom_call.1} parent=1 // pred_check_branch
      %97 = sbr.rel (0) target = $region33
    $region32: #{tpu_custom_call.1} parent=1 // pred_region
      %99 = dma.done [#allocation4], 16
    $region33: #{tpu_custom_call.1} parent=1 // pred_fallthru
      _
    %100 = vsyncpa [#allocation3], 1
    %101 = vsyncpa [#allocation6], 1
    %102 = vsyncpa [#allocation4], 1

</llo_original>
